<compile_context>
chip_gen: v7x
topology: tpu7x:2x2x1
jax: 0.10.0
libtpu: 0.0.40
codegen_flags: <defaults>
</compile_context>

<pallas_src>
import functools
import math

import numpy as np
import jax
import jax.numpy as jnp
from jax.experimental import pallas as pl
from jax.experimental.pallas import tpu as pltpu

_LANE = 128
_SUBLANE = 8


def _round_up(x, m):
    return ((x + m - 1) // m) * m


# ----------------------------- Pallas kernel -------------------------------

def _make_fused_kernel(depth):
    """Kernel refs: x, [W_t(scale-folded), shift] * depth, W_final_t, b_final, out."""

    def kernel(*refs):
        x_ref = refs[0]
        o_ref = refs[-1]
        act = x_ref[...]                              # (TB, IN_pad) bf16
        r = 1
        for _ in range(depth):
            wt_ref, sh_ref = refs[r], refs[r + 1]
            r += 2
            # bf16 MXU matmul, f32 accumulation. BN scale is pre-folded into W.
            y = jnp.dot(act, wt_ref[...], preferred_element_type=jnp.float32)
            # Linear-bias + eval-mode BatchNorm shift + ReLU in f32, then one
            # cast back to bf16 to feed the next layer's MXU.
            act = jnp.maximum(y + sh_ref[...], 0.0).astype(jnp.bfloat16)
        wf_ref, bf_ref = refs[r], refs[r + 1]
        y = jnp.dot(act, wf_ref[...], preferred_element_type=jnp.float32)
        o_ref[...] = (y + bf_ref[...]).astype(o_ref.dtype)

    return kernel


# ------------------------- parameter construction --------------------------

def init_sfnn_params(key, p, n, hidden, depth, h):
    """Deterministic synthetic parameters matching SFNN.__init__ shapes."""
    dims = [p * n] + [hidden] * depth
    params = {"blocks": []}
    for i in range(depth):
        in_f, out_f = dims[i], hidden
        key, kw, kb, kg, kbe, km, kv = jax.random.split(key, 7)
        blk = {
            # nn.Linear(in_f, out_f): weight (out_f, in_f), bias (out_f,)
            "w": jax.random.normal(kw, (out_f, in_f), jnp.float32) * 0.1,
            "b": jax.random.normal(kb, (out_f,), jnp.float32) * 0.1,
            # nn.BatchNorm1d(out_f) params + running stats (eval mode)
            "gamma": 1.0 + 0.1 * jax.random.normal(kg, (out_f,), jnp.float32),
            "beta": 0.1 * jax.random.normal(kbe, (out_f,), jnp.float32),
            "running_mean": 0.1 * jax.random.normal(km, (out_f,), jnp.float32),
            "running_var": 1.0 + 0.1 * jax.random.uniform(kv, (out_f,), jnp.float32),
        }
        params["blocks"].append(blk)
    key, kw, kb = jax.random.split(key, 3)
    params["final_w"] = jax.random.normal(kw, (h * n, hidden), jnp.float32) * 0.1
    params["final_b"] = jax.random.normal(kb, (h * n,), jnp.float32) * 0.1
    return params


def prepare_sfnn_params(params, *, eps=1e-5, lane=_LANE):
    """One-time prep: transpose weights to (in, out), fold eval-mode BN
    (scale into the weight, bias/mean/beta into a shift), zero-pad every
    feature dim to a multiple of 128 lanes, cast weights to bf16.
    The BN-scale fold is done in f32 BEFORE the bf16 cast."""
    blocks = params["blocks"]
    hidden = blocks[0]["w"].shape[0]
    in_f = blocks[0]["w"].shape[1]
    out_f = params["final_w"].shape[0]
    in_pad = _round_up(in_f, lane)
    hid_pad = _round_up(hidden, lane)
    out_pad = _round_up(out_f, lane)

    prep = {"blocks": []}
    for i, blk in enumerate(blocks):
        cur_in = blk["w"].shape[1]
        cur_in_pad = in_pad if i == 0 else hid_pad
        inv_std = 1.0 / jnp.sqrt(blk["running_var"] + eps)
        scale = blk["gamma"] * inv_std                              # (hidden,)
        shift = (blk["b"] - blk["running_mean"]) * scale + blk["beta"]
        w_scaled_t = jnp.transpose(blk["w"]) * scale[None, :]       # f32 fold
        w_t = jnp.zeros((cur_in_pad, hid_pad), jnp.float32)
        w_t = w_t.at[:cur_in, :hidden].set(w_scaled_t)
        shift_p = jnp.zeros((1, hid_pad), jnp.float32).at[0, :hidden].set(shift)
        prep["blocks"].append({
            "w_t": w_t.astype(jnp.bfloat16),   # (in_pad, hid_pad) bf16, BN-scaled
            "shift": shift_p,                  # (1, hid_pad) f32
        })

    fw_t = jnp.zeros((hid_pad, out_pad), jnp.float32)
    fw_t = fw_t.at[:hidden, :out_f].set(jnp.transpose(params["final_w"]))
    fb = jnp.zeros((1, out_pad), jnp.float32).at[0, :out_f].set(params["final_b"])
    prep["final_w_t"] = fw_t.astype(jnp.bfloat16)
    prep["final_b"] = fb
    return prep


# ------------------------------ forward pass --------------------------------

def _choose_batch_tile(B, batch_tile):
    # fewest tiles of <= batch_tile rows (minimizes batch padding), but give
    # the v7x megacore >=2 grid steps to shard when the batch is big enough.
    steps = max(1, math.ceil(B / batch_tile))
    if steps == 1 and B >= 2 * _SUBLANE:
        steps = 2
    return _round_up(math.ceil(B / steps), _SUBLANE)


def _vmem_limit_bytes(prep, tb, in_pad, out_pad, out_itemsize):
    hid_pad = prep["final_w_t"].shape[0]
    resident = sum(b["w_t"].size * 2 + b["shift"].size * 4 for b in prep["blocks"])
    resident += prep["final_w_t"].size * 2 + prep["final_b"].size * 4
    x_tiles = 2 * tb * in_pad * 2                       # double-buffered bf16 input
    o_tiles = 2 * tb * out_pad * out_itemsize           # double-buffered output
    live = 2 * tb * max(in_pad, hid_pad, out_pad) * 4   # f32 matmul result + headroom
    total = resident + x_tiles + o_tiles + live
    # 2x headroom, at least 32 MiB, capped at 64 MiB (v7x physical VMEM/TC).
    return int(min(64 * 2**20, max(32 * 2**20, 2 * total)))


def sfnn_fused_forward(prep, x, *, h, n, batch_tile=512, out_dtype=jnp.float32):
    """x: (B, p, n) f32 -> (B, h, n).  Single fused pallas_call."""
    B = x.shape[0]
    xf = x.reshape(B, -1).astype(jnp.float32)           # nn.Flatten (row-major)
    in_f = xf.shape[1]

    # padded sizes are derived from prepared weight shapes (static under jit)
    in_pad = prep["blocks"][0]["w_t"].shape[0]
    hid_pad = prep["final_w_t"].shape[0]
    out_pad = prep["final_w_t"].shape[1]
    out_f = h * n
    depth = len(prep["blocks"])

    if in_pad != in_f:
        xf = jnp.pad(xf, ((0, 0), (0, in_pad - in_f)))

    tb = _choose_batch_tile(B, batch_tile)
    b_pad = _round_up(B, tb)
    if b_pad != B:
        xf = jnp.pad(xf, ((0, b_pad - B), (0, 0)))
    # bf16 input: halves the only per-grid-step HBM DMA; MXU consumes bf16 anyway.
    xf = xf.astype(jnp.bfloat16)

    kernel = _make_fused_kernel(depth)

    def _resident(shape):
        # Grid-invariant operand: constant index_map -> DMA'd once; Buffered(1)
        # single-buffers it so it occupies 1x (not 2x) VMEM.
        return pl.BlockSpec(shape, lambda b: (0, 0), pipeline_mode=pl.Buffered(1))

    # x follows the batch grid (default double-buffered pipeline); weights stay
    # resident in VMEM for the whole call.
    in_specs = [pl.BlockSpec((tb, in_pad), lambda b: (b, 0))]
    operands = [xf]
    for blk in prep["blocks"]:
        in_specs += [_resident(blk["w_t"].shape), _resident(blk["shift"].shape)]
        operands += [blk["w_t"], blk["shift"]]
    in_specs += [_resident(prep["final_w_t"].shape), _resident(prep["final_b"].shape)]
    operands += [prep["final_w_t"], prep["final_b"]]

    # TODO(synk): for configs whose resident bf16 weights exceed ~48 MiB (v7x has
    # only 64 MiB VMEM/TC), switch to streaming weights per layer from HBM
    # (memory_space=pl.ANY + pltpu.emit_pipeline) instead of full residency.

    out_itemsize = np.dtype(out_dtype).itemsize
    weight_bytes = sum(int(o.size) * np.dtype(o.dtype).itemsize for o in operands[1:])
    flops = 2 * b_pad * (in_pad * hid_pad
                         + (depth - 1) * hid_pad * hid_pad
                         + hid_pad * out_pad)
    bytes_accessed = (b_pad * in_pad * 2 + weight_bytes + b_pad * out_pad * out_itemsize)

    out = pl.pallas_call(
        kernel,
        out_shape=jax.ShapeDtypeStruct((b_pad, out_pad), out_dtype),
        grid=(b_pad // tb,),
        in_specs=in_specs,
        out_specs=pl.BlockSpec((tb, out_pad), lambda b: (b, 0)),
        compiler_params=pltpu.CompilerParams(
            # batch axis is independent -> megacore sharding on v7x
            dimension_semantics=("parallel",),
            vmem_limit_bytes=_vmem_limit_bytes(prep, tb, in_pad, out_pad, out_itemsize),
        ),
        cost_estimate=pl.CostEstimate(flops=flops, transcendentals=0,
                                      bytes_accessed=bytes_accessed),
    )(*operands)

    return out[:B, :out_f].reshape(B, h, n)             # .view(-1, h, n)


# Pure-JAX f32 reference (eval-mode semantics) for a numerical sanity check.
def sfnn_reference(params, x, *, h, n, eps=1e-5):
    B = x.shape[0]
    xf = x.reshape(B, -1)
    for blk in params["blocks"]:
        y = xf @ blk["w"].T + blk["b"]
        y = (y - blk["running_mean"]) / jnp.sqrt(blk["running_var"] + eps)
        y = y * blk["gamma"] + blk["beta"]
        xf = jnp.maximum(y, 0.0)
    out = xf @ params["final_w"].T + params["final_b"]
    return out.reshape(B, h, n)


# TODO(synk): training-mode Dropout(0.1) RNG masks and BatchNorm1d batch
# statistics are not implemented; this kernel reproduces the eval-mode forward.


if __name__ == "__main__":
    # Small shapes consistent with the module
    p, n, hidden, depth, h = 4, 8, 32, 3, 2
    B = 8

    key = jax.random.PRNGKey(0)
    key, kx = jax.random.split(key)
    x = jax.random.normal(kx, (B, p, n), jnp.float32)

    params = init_sfnn_params(key, p, n, hidden, depth, h)
    prep = prepare_sfnn_params(params)          # one-time fold/transpose/pad/cast

    fwd = jax.jit(functools.partial(sfnn_fused_forward, h=h, n=n))
    y = fwd(prep, x)
    jax.block_until_ready(y)

    assert y.shape == (B, h, n), y.shape
    assert y.dtype == jnp.float32

    y_ref = sfnn_reference(params, x, h=h, n=n)
    assert bool(jnp.all(jnp.isfinite(y)))
    assert bool(jnp.allclose(y, y_ref, rtol=5e-2, atol=5e-2)), "mismatch vs reference"

    print("KERNEL_OK")
</pallas_src>

<mosaic_0001>
module attributes {stable_mosaic.version = 11 : i64} {
  func.func @kernel(%arg0: i32, %arg1: memref<8x128xbf16, #tpu.memory_space<vmem>>, %arg2: memref<128x128xbf16, #tpu.memory_space<vmem>>, %arg3: memref<1x128xf32, #tpu.memory_space<vmem>>, %arg4: memref<128x128xbf16, #tpu.memory_space<vmem>>, %arg5: memref<1x128xf32, #tpu.memory_space<vmem>>, %arg6: memref<128x128xbf16, #tpu.memory_space<vmem>>, %arg7: memref<1x128xf32, #tpu.memory_space<vmem>>, %arg8: memref<128x128xbf16, #tpu.memory_space<vmem>>, %arg9: memref<1x128xf32, #tpu.memory_space<vmem>>, %arg10: memref<8x128xf32, #tpu.memory_space<vmem>>) attributes {dimension_semantics = [#tpu.dimension_semantics<parallel>], iteration_bounds = array<i64: 1>, scalar_prefetch = 0 : i64, scratch_operands = 0 : i64, tpu.core_type = #tpu.core_type<tc>, window_params = [{transform_indices = @transform_0, window_bounds = array<i64: 8, 128>}, {pipeline_mode = #tpu.pipeline_mode<synchronous>, transform_indices = @transform_1, window_bounds = array<i64: 128, 128>}, {pipeline_mode = #tpu.pipeline_mode<synchronous>, transform_indices = @transform_2, window_bounds = array<i64: 1, 128>}, {pipeline_mode = #tpu.pipeline_mode<synchronous>, transform_indices = @transform_3, window_bounds = array<i64: 128, 128>}, {pipeline_mode = #tpu.pipeline_mode<synchronous>, transform_indices = @transform_4, window_bounds = array<i64: 1, 128>}, {pipeline_mode = #tpu.pipeline_mode<synchronous>, transform_indices = @transform_5, window_bounds = array<i64: 128, 128>}, {pipeline_mode = #tpu.pipeline_mode<synchronous>, transform_indices = @transform_6, window_bounds = array<i64: 1, 128>}, {pipeline_mode = #tpu.pipeline_mode<synchronous>, transform_indices = @transform_7, window_bounds = array<i64: 128, 128>}, {pipeline_mode = #tpu.pipeline_mode<synchronous>, transform_indices = @transform_8, window_bounds = array<i64: 1, 128>}, {transform_indices = @transform_9, window_bounds = array<i64: 8, 128>}]} {
    %c0 = arith.constant 0 : index
    %c0_0 = arith.constant 0 : index
    %0 = vector.load %arg1[%c0, %c0_0] : memref<8x128xbf16, #tpu.memory_space<vmem>>, vector<8x128xbf16>
    %c0_1 = arith.constant 0 : index
    %c0_2 = arith.constant 0 : index
    %1 = vector.load %arg2[%c0_1, %c0_2] : memref<128x128xbf16, #tpu.memory_space<vmem>>, vector<128x128xbf16>
    %cst = arith.constant dense<0.000000e+00> : vector<8x128xf32>
    %2 = tpu.matmul %0, %1, %cst {dimension_numbers = #tpu.dot_dimension_numbers<[1], [0], [0], [1], [0, 0, 1, 1], [], []>} : vector<8x128xbf16>, vector<128x128xbf16>, vector<8x128xf32> -> vector<8x128xf32>
    %c0_3 = arith.constant 0 : index
    %c0_4 = arith.constant 0 : index
    %3 = vector.load %arg3[%c0_3, %c0_4] : memref<1x128xf32, #tpu.memory_space<vmem>>, vector<1x128xf32>
    %4 = vector.broadcast %3 : vector<1x128xf32> to vector<8x128xf32>
    %5 = arith.addf %2, %4 : vector<8x128xf32>
    %cst_5 = arith.constant 0.000000e+00 : f32
    %6 = vector.broadcast %cst_5 : f32 to vector<8x128xf32>
    %7 = arith.maximumf %5, %6 : vector<8x128xf32>
    %8 = arith.truncf %7 : vector<8x128xf32> to vector<8x128xbf16>
    %c0_6 = arith.constant 0 : index
    %c0_7 = arith.constant 0 : index
    %9 = vector.load %arg4[%c0_6, %c0_7] : memref<128x128xbf16, #tpu.memory_space<vmem>>, vector<128x128xbf16>
    %cst_8 = arith.constant dense<0.000000e+00> : vector<8x128xf32>
    %10 = tpu.matmul %8, %9, %cst_8 {dimension_numbers = #tpu.dot_dimension_numbers<[1], [0], [0], [1], [0, 0, 1, 1], [], []>} : vector<8x128xbf16>, vector<128x128xbf16>, vector<8x128xf32> -> vector<8x128xf32>
    %c0_9 = arith.constant 0 : index
    %c0_10 = arith.constant 0 : index
    %11 = vector.load %arg5[%c0_9, %c0_10] : memref<1x128xf32, #tpu.memory_space<vmem>>, vector<1x128xf32>
    %12 = vector.broadcast %11 : vector<1x128xf32> to vector<8x128xf32>
    %13 = arith.addf %10, %12 : vector<8x128xf32>
    %cst_11 = arith.constant 0.000000e+00 : f32
    %14 = vector.broadcast %cst_11 : f32 to vector<8x128xf32>
    %15 = arith.maximumf %13, %14 : vector<8x128xf32>
    %16 = arith.truncf %15 : vector<8x128xf32> to vector<8x128xbf16>
    %c0_12 = arith.constant 0 : index
    %c0_13 = arith.constant 0 : index
    %17 = vector.load %arg6[%c0_12, %c0_13] : memref<128x128xbf16, #tpu.memory_space<vmem>>, vector<128x128xbf16>
    %cst_14 = arith.constant dense<0.000000e+00> : vector<8x128xf32>
    %18 = tpu.matmul %16, %17, %cst_14 {dimension_numbers = #tpu.dot_dimension_numbers<[1], [0], [0], [1], [0, 0, 1, 1], [], []>} : vector<8x128xbf16>, vector<128x128xbf16>, vector<8x128xf32> -> vector<8x128xf32>
    %c0_15 = arith.constant 0 : index
    %c0_16 = arith.constant 0 : index
    %19 = vector.load %arg7[%c0_15, %c0_16] : memref<1x128xf32, #tpu.memory_space<vmem>>, vector<1x128xf32>
    %20 = vector.broadcast %19 : vector<1x128xf32> to vector<8x128xf32>
    %21 = arith.addf %18, %20 : vector<8x128xf32>
    %cst_17 = arith.constant 0.000000e+00 : f32
    %22 = vector.broadcast %cst_17 : f32 to vector<8x128xf32>
    %23 = arith.maximumf %21, %22 : vector<8x128xf32>
    %24 = arith.truncf %23 : vector<8x128xf32> to vector<8x128xbf16>
    %c0_18 = arith.constant 0 : index
    %c0_19 = arith.constant 0 : index
    %25 = vector.load %arg8[%c0_18, %c0_19] : memref<128x128xbf16, #tpu.memory_space<vmem>>, vector<128x128xbf16>
    %cst_20 = arith.constant dense<0.000000e+00> : vector<8x128xf32>
    %26 = tpu.matmul %24, %25, %cst_20 {dimension_numbers = #tpu.dot_dimension_numbers<[1], [0], [0], [1], [0, 0, 1, 1], [], []>} : vector<8x128xbf16>, vector<128x128xbf16>, vector<8x128xf32> -> vector<8x128xf32>
    %c0_21 = arith.constant 0 : index
    %c0_22 = arith.constant 0 : index
    %27 = vector.load %arg9[%c0_21, %c0_22] : memref<1x128xf32, #tpu.memory_space<vmem>>, vector<1x128xf32>
    %28 = vector.broadcast %27 : vector<1x128xf32> to vector<8x128xf32>
    %29 = arith.addf %26, %28 : vector<8x128xf32>
    %c0_23 = arith.constant 0 : index
    %c0_24 = arith.constant 0 : index
    %30 = vector.load %arg10[%c0_23, %c0_24] : memref<8x128xf32, #tpu.memory_space<vmem>>, vector<8x128xf32>
    tpu.vector_store %arg10[%c0_23, %c0_24], %29 {strides = array<i32>} : memref<8x128xf32, #tpu.memory_space<vmem>>, vector<8x128xf32>,
    return
  }
  func.func @transform_0(%arg0: i32) -> (i32, i32) {
    %c0_i32 = arith.constant 0 : i32
    %c0_i32_0 = arith.constant 0 : i32
    return %arg0, %c0_i32 : i32, i32
  }
  func.func @transform_1(%arg0: i32) -> (i32, i32) {
    %c0_i32 = arith.constant 0 : i32
    %c0_i32_0 = arith.constant 0 : i32
    %c0_i32_1 = arith.constant 0 : i32
    return %c0_i32, %c0_i32_0 : i32, i32
  }
  func.func @transform_2(%arg0: i32) -> (i32, i32) {
    %c0_i32 = arith.constant 0 : i32
    %c0_i32_0 = arith.constant 0 : i32
    %c0_i32_1 = arith.constant 0 : i32
    return %c0_i32, %c0_i32_0 : i32, i32
  }
  func.func @transform_3(%arg0: i32) -> (i32, i32) {
    %c0_i32 = arith.constant 0 : i32
    %c0_i32_0 = arith.constant 0 : i32
    %c0_i32_1 = arith.constant 0 : i32
    return %c0_i32, %c0_i32_0 : i32, i32
  }
  func.func @transform_4(%arg0: i32) -> (i32, i32) {
    %c0_i32 = arith.constant 0 : i32
    %c0_i32_0 = arith.constant 0 : i32
    %c0_i32_1 = arith.constant 0 : i32
    return %c0_i32, %c0_i32_0 : i32, i32
  }
  func.func @transform_5(%arg0: i32) -> (i32, i32) {
    %c0_i32 = arith.constant 0 : i32
    %c0_i32_0 = arith.constant 0 : i32
    %c0_i32_1 = arith.constant 0 : i32
    return %c0_i32, %c0_i32_0 : i32, i32
  }
  func.func @transform_6(%arg0: i32) -> (i32, i32) {
    %c0_i32 = arith.constant 0 : i32
    %c0_i32_0 = arith.constant 0 : i32
    %c0_i32_1 = arith.constant 0 : i32
    return %c0_i32, %c0_i32_0 : i32, i32
  }
  func.func @transform_7(%arg0: i32) -> (i32, i32) {
    %c0_i32 = arith.constant 0 : i32
    %c0_i32_0 = arith.constant 0 : i32
    %c0_i32_1 = arith.constant 0 : i32
    return %c0_i32, %c0_i32_0 : i32, i32
  }
  func.func @transform_8(%arg0: i32) -> (i32, i32) {
    %c0_i32 = arith.constant 0 : i32
    %c0_i32_0 = arith.constant 0 : i32
    %c0_i32_1 = arith.constant 0 : i32
    return %c0_i32, %c0_i32_0 : i32, i32
  }
  func.func @transform_9(%arg0: i32) -> (i32, i32) {
    %c0_i32 = arith.constant 0 : i32
    %c0_i32_0 = arith.constant 0 : i32
    return %arg0, %c0_i32 : i32, i32
  }
}

</mosaic_0001>

<llo_original>
// kernel: sfnn_fused_forward.1
$region0: #{sfnn_fused_forward.1}
  #allocation0 [shape = 'u32[]', space=smem, size = 0x4, offset = 0x4, fixed_abs, tag = 'smem constant byte address 0x4 - core index']
  #allocation1 [shape = 'u32[144,128]{1,0:T(1,128)}', space=vmem, size = 0x12000, scoped, tag = 'internal scratch']
  %s0 = inlined_call_operand.vmem [shape: bf16[8,128], index: 0, kind: input, shape index: {}]
  %s1 = inlined_call_operand.vmem [shape: bf16[128,128], index: 1, kind: input, shape index: {}]
  %s2 = inlined_call_operand.vmem [shape: f32[1,128], index: 2, kind: input, shape index: {}]
  %s3 = inlined_call_operand.hbm [shape: bf16[128,128], index: 3, kind: input, shape index: {}]
  %s4 = inlined_call_operand.vmem [shape: f32[1,128], index: 4, kind: input, shape index: {}]
  %s5 = inlined_call_operand.hbm [shape: bf16[128,128], index: 5, kind: input, shape index: {}]
  %s6 = inlined_call_operand.vmem [shape: f32[1,128], index: 6, kind: input, shape index: {}]
  %s7 = inlined_call_operand.hbm [shape: bf16[128,128], index: 7, kind: input, shape index: {}]
  %s8 = inlined_call_operand.vmem [shape: f32[1,128], index: 8, kind: input, shape index: {}]
  %s9 = inlined_call_operand.vmem [shape: f32[8,128], index: 9, kind: output, shape index: {}]
  %s10 = sld [smem:[#allocation0]]
  $region58: #{sfnn_fused_forward.1} parent=0
    _
  %s12 = ssub.s32 1, %s10
  %s13 = scalar_select 0, %s12, %s10
  $region1: #{sfnn_fused_forward.1} parent=0
    #allocation2 [shape = 'u8[32768]{0}', space=vmem, size = 0x8000, scoped, tag = 'input window, operand 3, single buffered']
    #allocation3 [shape = 's32[1]{0}', space=sflag, size = 0x4, scoped, tag = 'scoped memory for sfnn_fused_forward.1']
    #allocation4 [shape = 'u8[32768]{0}', space=vmem, size = 0x8000, scoped, tag = 'input window, operand 5, single buffered']
    #allocation5 [shape = 's32[1]{0}', space=sflag, size = 0x4, scoped, tag = 'scoped memory for sfnn_fused_forward.1']
    #allocation6 [shape = 'u8[32768]{0}', space=vmem, size = 0x8000, scoped, tag = 'input window, operand 7, single buffered']
    %14 = vsyncpa [#allocation3], 0
    %15 = vsyncpa [#allocation5], 0
    // Predicated region
    $region2: #{sfnn_fused_forward.1} parent=1 // pred_check
      _
    $region3: #{sfnn_fused_forward.1} parent=1 // pred_check_branch
      %17 = sbr.rel (0) target = $region5
    $region4: #{sfnn_fused_forward.1} parent=1 // pred_region
      _
    $region5: #{sfnn_fused_forward.1} parent=1 // pred_fallthru
      _
    // Predicated region
    $region6: #{sfnn_fused_forward.1} parent=1 // pred_check
      _
    $region7: #{sfnn_fused_forward.1} parent=1 // pred_check_branch
      %19 = sbr.rel (0) target = $region9
    $region8: #{sfnn_fused_forward.1} parent=1 // pred_region
      _
    $region9: #{sfnn_fused_forward.1} parent=1 // pred_fallthru
      _
    // Predicated region
    $region10: #{sfnn_fused_forward.1} parent=1 // pred_check
      _
    $region11: #{sfnn_fused_forward.1} parent=1 // pred_check_branch
      %21 = sbr.rel (0) target = $region13
    $region12: #{sfnn_fused_forward.1} parent=1 // pred_region
      _
    $region13: #{sfnn_fused_forward.1} parent=1 // pred_fallthru
      _
    // Predicated region
    $region14: #{sfnn_fused_forward.1} parent=1 // pred_check
      _
    $region15: #{sfnn_fused_forward.1} parent=1 // pred_check_branch
      %23 = sbr.rel (0) target = $region17
    $region16: #{sfnn_fused_forward.1} parent=1 // pred_region
      %s25 = ssub.s32 1024, 1024
      %26 = vsyncadd [#allocation3], %s25
      %s27 = sshll.u32 [#allocation2], 4
      %s28 = int_to_ptr.vmem [resolvable:$true] %s27
      %33 = dma.hbm_to_vmem [thread:$0]  %s3, 1024, %s28, [#allocation3], 64, 64, 4
    $region17: #{sfnn_fused_forward.1} parent=1 // pred_fallthru
      _
    // Predicated region
    $region18: #{sfnn_fused_forward.1} parent=1 // pred_check
      _
    $region19: #{sfnn_fused_forward.1} parent=1 // pred_check_branch
      %35 = sbr.rel (0) target = $region21
    $region20: #{sfnn_fused_forward.1} parent=1 // pred_region
      _
    $region21: #{sfnn_fused_forward.1} parent=1 // pred_fallthru
      _
    // Predicated region
    $region22: #{sfnn_fused_forward.1} parent=1 // pred_check
      _
    $region23: #{sfnn_fused_forward.1} parent=1 // pred_check_branch
      %37 = sbr.rel (0) target = $region25
    $region24: #{sfnn_fused_forward.1} parent=1 // pred_region
      %s39 = ssub.s32 1024, 1024
      %40 = vsyncadd [#allocation5], %s39
      %s41 = sshll.u32 [#allocation4], 4
      %s42 = int_to_ptr.vmem [resolvable:$true] %s41
      %47 = dma.hbm_to_vmem [thread:$0]  %s5, 1024, %s42, [#allocation5], 64, 64, 4
    $region25: #{sfnn_fused_forward.1} parent=1 // pred_fallthru
      _
    // Predicated region
    $region26: #{sfnn_fused_forward.1} parent=1 // pred_check
      _
    $region27: #{sfnn_fused_forward.1} parent=1 // pred_check_branch
      %49 = sbr.rel (0) target = $region29
    $region28: #{sfnn_fused_forward.1} parent=1 // pred_region
      _
    $region29: #{sfnn_fused_forward.1} parent=1 // pred_fallthru
      _
    // Predicated region
    $region30: #{sfnn_fused_forward.1} parent=1 // pred_check
      _
    $region31: #{sfnn_fused_forward.1} parent=1 // pred_check_branch
      %51 = sbr.rel (0) target = $region33
    $region32: #{sfnn_fused_forward.1} parent=1 // pred_region
      %s53 = ssub.s32 1024, 1024
      %54 = vsyncadd [#allocation5], %s53
      %s55 = sshll.u32 [#allocation6], 4
      %s56 = int_to_ptr.vmem [resolvable:$true] %s55
      %61 = dma.hbm_to_vmem [thread:$0]  %s7, 1024, %s56, [#allocation5], 64, 64, 4
    $region33: #{sfnn_fused_forward.1} parent=1 // pred_fallthru
      _
    // Predicated region
    $region34: #{sfnn_fused_forward.1} parent=1 // pred_check
      _
    $region35: #{sfnn_fused_forward.1} parent=1 // pred_check_branch
      %63 = sbr.rel (0) target = $region37
    $region36: #{sfnn_fused_forward.1} parent=1 // pred_region
      _
    $region37: #{sfnn_fused_forward.1} parent=1 // pred_fallthru
      _
    // Predicated region
    $region38: #{sfnn_fused_forward.1} parent=1 // pred_check
      _
    $region39: #{sfnn_fused_forward.1} parent=1 // pred_check_branch
      %65 = sbr.rel (0) target = $region41
    $region40: #{sfnn_fused_forward.1} parent=1 // pred_region
      %66 = dma.done [#allocation3], 1024
    $region41: #{sfnn_fused_forward.1} parent=1 // pred_fallthru
      _
    // Predicated region
    $region42: #{sfnn_fused_forward.1} parent=1 // pred_check
      _
    $region43: #{sfnn_fused_forward.1} parent=1 // pred_check_branch
      %68 = sbr.rel (0) target = $region45
    $region44: #{sfnn_fused_forward.1} parent=1 // pred_region
      %69 = dma.done [#allocation5], 1024
    $region45: #{sfnn_fused_forward.1} parent=1 // pred_fallthru
      _
    // Predicated region
    $region46: #{sfnn_fused_forward.1} parent=1 // pred_check
      _
    $region47: #{sfnn_fused_forward.1} parent=1 // pred_check_branch
      %71 = sbr.rel (0) target = $region49
    $region48: #{sfnn_fused_forward.1} parent=1 // pred_region
      %72 = dma.done [#allocation5], 1024
    $region49: #{sfnn_fused_forward.1} parent=1 // pred_fallthru
      _
    %v74 = vld [vmem:[%s0] sm:$0xf]
    %v75 = vld [vmem:[%s1] sm:$0xf]
    %v76 = vld [vmem:[%s1 + $0x4] sm:$0xf]
    %v77 = vld [vmem:[%s1 + $0x8] sm:$0xf]
    %v78 = vld [vmem:[%s1 + $0xc] sm:$0xf]
    %v79 = vld [vmem:[%s1 + $0x10] sm:$0xf]
    %v80 = vld [vmem:[%s1 + $0x14] sm:$0xf]
    %v81 = vld [vmem:[%s1 + $0x18] sm:$0xf]
    %v82 = vld [vmem:[%s1 + $0x1c] sm:$0xf]
    %v83 = vld [vmem:[%s1 + $0x20] sm:$0xf]
    %v84 = vld [vmem:[%s1 + $0x24] sm:$0xf]
    %v85 = vld [vmem:[%s1 + $0x28] sm:$0xf]
    %v86 = vld [vmem:[%s1 + $0x2c] sm:$0xf]
    %v87 = vld [vmem:[%s1 + $0x30] sm:$0xf]
    %v88 = vld [vmem:[%s1 + $0x34] sm:$0xf]
    %v89 = vld [vmem:[%s1 + $0x38] sm:$0xf]
    %v90 = vld [vmem:[%s1 + $0x3c] sm:$0xf]
    %v91 = vld [vmem:[%s2] sm:$0x1]
    %v93 = vlaneseq
    %v94 = vshrl.u32 %v93, 7
    %v95 = vsub.s32 0, %v94
    %v96 = vrot.slane %v91, %v95
    %v114 = vunpack.c.l.b16 %v75
    %v115 = vunpack.c.l.b16 %v76
    %v116 = vunpack.c.l.b16 %v77
    %v117 = vunpack.c.l.b16 %v78
    %v118 = vunpack.c.l.b16 %v79
    %v119 = vunpack.c.l.b16 %v80
    %v120 = vunpack.c.l.b16 %v81
    %v121 = vunpack.c.l.b16 %v82
    %v122 = vunpack.c.l.b16 %v83
    %v123 = vunpack.c.l.b16 %v84
    %v124 = vunpack.c.l.b16 %v85
    %v125 = vunpack.c.l.b16 %v86
    %v126 = vunpack.c.l.b16 %v87
    %v127 = vunpack.c.l.b16 %v88
    %v128 = vunpack.c.l.b16 %v89
    %v129 = vunpack.c.l.b16 %v90
    %v130 = vpack.c.b16 %v115, %v114
    %v131 = vpack.c.b16 %v117, %v116
    %v132 = vpack.c.b16 %v119, %v118
    %v133 = vpack.c.b16 %v121, %v120
    %v134 = vpack.c.b16 %v123, %v122
    %v135 = vpack.c.b16 %v125, %v124
    %v136 = vpack.c.b16 %v127, %v126
    %v137 = vpack.c.b16 %v129, %v128
    %146 = vmatprep.subr.bf16.mxu0 0
    %147 = vmatpush1.bf16.msra.mxu0 %v130
    %148 = vmatprep.subr.bf16.mxu0 0
    %149 = vmatpush1.bf16.msra.mxu0 %v131
    %150 = vmatprep.subr.bf16.mxu0 0
    %151 = vmatpush1.bf16.msra.mxu0 %v132
    %152 = vmatprep.subr.bf16.mxu0 0
    %153 = vmatpush1.bf16.msra.mxu0 %v133
    %154 = vmatprep.subr.bf16.mxu0 0
    %155 = vmatpush1.bf16.msra.mxu0 %v134
    %156 = vmatprep.subr.bf16.mxu0 0
    %157 = vmatpush1.bf16.msra.mxu0 %v135
    %158 = vmatprep.subr.bf16.mxu0 0
    %159 = vmatpush1.bf16.msra.mxu0 %v136
    %160 = vmatprep.subr.bf16.mxu0 0
    %161 = vmatpush1.bf16.msra.mxu0 %v137
    %162 = vmatprep.subr.bf16.mxu0 0
    %163 = vmatpush1.bf16.msra.mxu0 0
    %164 = vmatprep.subr.bf16.mxu0 0
    %165 = vmatpush1.bf16.msra.mxu0 0
    %166 = vmatprep.subr.bf16.mxu0 0
    %167 = vmatpush1.bf16.msra.mxu0 0
    %168 = vmatprep.subr.bf16.mxu0 0
    %169 = vmatpush1.bf16.msra.mxu0 0
    %170 = vmatprep.subr.bf16.mxu0 0
    %171 = vmatpush1.bf16.msra.mxu0 0
    %172 = vmatprep.subr.bf16.mxu0 0
    %173 = vmatpush1.bf16.msra.mxu0 0
    %174 = vmatprep.subr.bf16.mxu0 0
    %175 = vmatpush1.bf16.msra.mxu0 0
    %176 = vmatprep.subr.bf16.mxu0 0
    %177 = vmatpush1.bf16.msra.mxu0 0
    %178 = vmatprep.mubr.bf16.mxu0 0
    %179 = vmatmul.mubr.bf16.gmra.mrb[0].mxu0 %v74
    %v180 = vpop.f32.mrb[0].mxu0
    %v181 = vadd.f32 %v96, %v180
    %v182 = vpop.f32.mrb[0].mxu0
    %v183 = vpop.f32.mrb[0].mxu0
    %v184 = vpop.f32.mrb[0].mxu0
    %185 = vdwg.mxu0
    %v186 = vmax.f32 %v181, 0.0
    %v187 = vpack.c.bf16 %v186, %v186
    %v188 = vld [vmem:[#allocation2] sm:$0xf]
    %v189 = vld [vmem:[#allocation2 + $0x4] sm:$0xf]
    %v190 = vld [vmem:[#allocation2 + $0x8] sm:$0xf]
    %v191 = vld [vmem:[#allocation2 + $0xc] sm:$0xf]
    %v192 = vld [vmem:[#allocation2 + $0x10] sm:$0xf]
    %v193 = vld [vmem:[#allocation2 + $0x14] sm:$0xf]
    %v194 = vld [vmem:[#allocation2 + $0x18] sm:$0xf]
    %v195 = vld [vmem:[#allocation2 + $0x1c] sm:$0xf]
    %v196 = vld [vmem:[#allocation2 + $0x20] sm:$0xf]
    %v197 = vld [vmem:[#allocation2 + $0x24] sm:$0xf]
    %v198 = vld [vmem:[#allocation2 + $0x28] sm:$0xf]
    %v199 = vld [vmem:[#allocation2 + $0x2c] sm:$0xf]
    %v200 = vld [vmem:[#allocation2 + $0x30] sm:$0xf]
    %v201 = vld [vmem:[#allocation2 + $0x34] sm:$0xf]
    %v202 = vld [vmem:[#allocation2 + $0x38] sm:$0xf]
    %v203 = vld [vmem:[#allocation2 + $0x3c] sm:$0xf]
    %v204 = vld [vmem:[%s4] sm:$0x1]
    %v206 = vlaneseq
    %v207 = vshrl.u32 %v206, 7
    %v208 = vsub.s32 0, %v207
    %v209 = vrot.slane %v204, %v208
    %v227 = vunpack.c.l.b16 %v188
    %v228 = vunpack.c.l.b16 %v189
    %v229 = vunpack.c.l.b16 %v190
    %v230 = vunpack.c.l.b16 %v191
    %v231 = vunpack.c.l.b16 %v192
    %v232 = vunpack.c.l.b16 %v193
    %v233 = vunpack.c.l.b16 %v194
    %v234 = vunpack.c.l.b16 %v195
    %v235 = vunpack.c.l.b16 %v196
    %v236 = vunpack.c.l.b16 %v197
    %v237 = vunpack.c.l.b16 %v198
    %v238 = vunpack.c.l.b16 %v199
    %v239 = vunpack.c.l.b16 %v200
    %v240 = vunpack.c.l.b16 %v201
    %v241 = vunpack.c.l.b16 %v202
    %v242 = vunpack.c.l.b16 %v203
    %v243 = vpack.c.b16 %v228, %v227
    %v244 = vpack.c.b16 %v230, %v229
    %v245 = vpack.c.b16 %v232, %v231
    %v246 = vpack.c.b16 %v234, %v233
    %v247 = vpack.c.b16 %v236, %v235
    %v248 = vpack.c.b16 %v238, %v237
    %v249 = vpack.c.b16 %v240, %v239
    %v250 = vpack.c.b16 %v242, %v241
    %259 = vmatprep.subr.bf16.mxu0 0
    %260 = vmatpush1.bf16.msra.mxu0 %v243
    %261 = vmatprep.subr.bf16.mxu0 0
    %262 = vmatpush1.bf16.msra.mxu0 %v244
    %263 = vmatprep.subr.bf16.mxu0 0
    %264 = vmatpush1.bf16.msra.mxu0 %v245
    %265 = vmatprep.subr.bf16.mxu0 0
    %266 = vmatpush1.bf16.msra.mxu0 %v246
    %267 = vmatprep.subr.bf16.mxu0 0
    %268 = vmatpush1.bf16.msra.mxu0 %v247
    %269 = vmatprep.subr.bf16.mxu0 0
    %270 = vmatpush1.bf16.msra.mxu0 %v248
    %271 = vmatprep.subr.bf16.mxu0 0
    %272 = vmatpush1.bf16.msra.mxu0 %v249
    %273 = vmatprep.subr.bf16.mxu0 0
    %274 = vmatpush1.bf16.msra.mxu0 %v250
    %275 = vmatprep.subr.bf16.mxu0 0
    %276 = vmatpush1.bf16.msra.mxu0 0
    %277 = vmatprep.subr.bf16.mxu0 0
    %278 = vmatpush1.bf16.msra.mxu0 0
    %279 = vmatprep.subr.bf16.mxu0 0
    %280 = vmatpush1.bf16.msra.mxu0 0
    %281 = vmatprep.subr.bf16.mxu0 0
    %282 = vmatpush1.bf16.msra.mxu0 0
    %283 = vmatprep.subr.bf16.mxu0 0
    %284 = vmatpush1.bf16.msra.mxu0 0
    %285 = vmatprep.subr.bf16.mxu0 0
    %286 = vmatpush1.bf16.msra.mxu0 0
    %287 = vmatprep.subr.bf16.mxu0 0
    %288 = vmatpush1.bf16.msra.mxu0 0
    %289 = vmatprep.subr.bf16.mxu0 0
    %290 = vmatpush1.bf16.msra.mxu0 0
    %291 = vmatprep.mubr.bf16.mxu0 0
    %292 = vmatmul.mubr.bf16.gmra.mrb[0].mxu0 %v187
    %v293 = vpop.f32.mrb[0].mxu0
    %v294 = vadd.f32 %v209, %v293
    %v295 = vpop.f32.mrb[0].mxu0
    %v296 = vpop.f32.mrb[0].mxu0
    %v297 = vpop.f32.mrb[0].mxu0
    %298 = vdwg.mxu0
    %v299 = vmax.f32 %v294, 0.0
    %v300 = vpack.c.bf16 %v299, %v299
    %v301 = vld [vmem:[#allocation4] sm:$0xf]
    %v302 = vld [vmem:[#allocation4 + $0x4] sm:$0xf]
    %v303 = vld [vmem:[#allocation4 + $0x8] sm:$0xf]
    %v304 = vld [vmem:[#allocation4 + $0xc] sm:$0xf]
    %v305 = vld [vmem:[#allocation4 + $0x10] sm:$0xf]
    %v306 = vld [vmem:[#allocation4 + $0x14] sm:$0xf]
    %v307 = vld [vmem:[#allocation4 + $0x18] sm:$0xf]
    %v308 = vld [vmem:[#allocation4 + $0x1c] sm:$0xf]
    %v309 = vld [vmem:[#allocation4 + $0x20] sm:$0xf]
    %v310 = vld [vmem:[#allocation4 + $0x24] sm:$0xf]
    %v311 = vld [vmem:[#allocation4 + $0x28] sm:$0xf]
    %v312 = vld [vmem:[#allocation4 + $0x2c] sm:$0xf]
    %v313 = vld [vmem:[#allocation4 + $0x30] sm:$0xf]
    %v314 = vld [vmem:[#allocation4 + $0x34] sm:$0xf]
    %v315 = vld [vmem:[#allocation4 + $0x38] sm:$0xf]
    %v316 = vld [vmem:[#allocation4 + $0x3c] sm:$0xf]
    %v317 = vld [vmem:[%s6] sm:$0x1]
    %v319 = vlaneseq
    %v320 = vshrl.u32 %v319, 7
    %v321 = vsub.s32 0, %v320
    %v322 = vrot.slane %v317, %v321
    %v340 = vunpack.c.l.b16 %v301
    %v341 = vunpack.c.l.b16 %v302
    %v342 = vunpack.c.l.b16 %v303
    %v343 = vunpack.c.l.b16 %v304
    %v344 = vunpack.c.l.b16 %v305
    %v345 = vunpack.c.l.b16 %v306
    %v346 = vunpack.c.l.b16 %v307
    %v347 = vunpack.c.l.b16 %v308
    %v348 = vunpack.c.l.b16 %v309
    %v349 = vunpack.c.l.b16 %v310
    %v350 = vunpack.c.l.b16 %v311
    %v351 = vunpack.c.l.b16 %v312
    %v352 = vunpack.c.l.b16 %v313
    %v353 = vunpack.c.l.b16 %v314
    %v354 = vunpack.c.l.b16 %v315
    %v355 = vunpack.c.l.b16 %v316
    %v356 = vpack.c.b16 %v341, %v340
    %v357 = vpack.c.b16 %v343, %v342
    %v358 = vpack.c.b16 %v345, %v344
    %v359 = vpack.c.b16 %v347, %v346
    %v360 = vpack.c.b16 %v349, %v348
    %v361 = vpack.c.b16 %v351, %v350
    %v362 = vpack.c.b16 %v353, %v352
    %v363 = vpack.c.b16 %v355, %v354
    %372 = vmatprep.subr.bf16.mxu0 0
    %373 = vmatpush1.bf16.msra.mxu0 %v356
    %374 = vmatprep.subr.bf16.mxu0 0
    %375 = vmatpush1.bf16.msra.mxu0 %v357
    %376 = vmatprep.subr.bf16.mxu0 0
    %377 = vmatpush1.bf16.msra.mxu0 %v358
    %378 = vmatprep.subr.bf16.mxu0 0
    %379 = vmatpush1.bf16.msra.mxu0 %v359
    %380 = vmatprep.subr.bf16.mxu0 0
    %381 = vmatpush1.bf16.msra.mxu0 %v360
    %382 = vmatprep.subr.bf16.mxu0 0
    %383 = vmatpush1.bf16.msra.mxu0 %v361
    %384 = vmatprep.subr.bf16.mxu0 0
    %385 = vmatpush1.bf16.msra.mxu0 %v362
    %386 = vmatprep.subr.bf16.mxu0 0
    %387 = vmatpush1.bf16.msra.mxu0 %v363
    %388 = vmatprep.subr.bf16.mxu0 0
    %389 = vmatpush1.bf16.msra.mxu0 0
    %390 = vmatprep.subr.bf16.mxu0 0
    %391 = vmatpush1.bf16.msra.mxu0 0
    %392 = vmatprep.subr.bf16.mxu0 0
    %393 = vmatpush1.bf16.msra.mxu0 0
    %394 = vmatprep.subr.bf16.mxu0 0
    %395 = vmatpush1.bf16.msra.mxu0 0
    %396 = vmatprep.subr.bf16.mxu0 0
    %397 = vmatpush1.bf16.msra.mxu0 0
    %398 = vmatprep.subr.bf16.mxu0 0
    %399 = vmatpush1.bf16.msra.mxu0 0
    %400 = vmatprep.subr.bf16.mxu0 0
    %401 = vmatpush1.bf16.msra.mxu0 0
    %402 = vmatprep.subr.bf16.mxu0 0
    %403 = vmatpush1.bf16.msra.mxu0 0
    %404 = vmatprep.mubr.bf16.mxu0 0
    %405 = vmatmul.mubr.bf16.gmra.mrb[0].mxu0 %v300
    %v406 = vpop.f32.mrb[0].mxu0
    %v407 = vadd.f32 %v322, %v406
    %v408 = vpop.f32.mrb[0].mxu0
    %v409 = vpop.f32.mrb[0].mxu0
    %v410 = vpop.f32.mrb[0].mxu0
    %411 = vdwg.mxu0
    %v412 = vmax.f32 %v407, 0.0
    %v413 = vpack.c.bf16 %v412, %v412
    %v414 = vld [vmem:[#allocation6] sm:$0xf]
    %v415 = vld [vmem:[#allocation6 + $0x4] sm:$0xf]
    %v416 = vld [vmem:[#allocation6 + $0x8] sm:$0xf]
    %v417 = vld [vmem:[#allocation6 + $0xc] sm:$0xf]
    %v418 = vld [vmem:[#allocation6 + $0x10] sm:$0xf]
    %v419 = vld [vmem:[#allocation6 + $0x14] sm:$0xf]
    %v420 = vld [vmem:[#allocation6 + $0x18] sm:$0xf]
    %v421 = vld [vmem:[#allocation6 + $0x1c] sm:$0xf]
    %v422 = vld [vmem:[#allocation6 + $0x20] sm:$0xf]
    %v423 = vld [vmem:[#allocation6 + $0x24] sm:$0xf]
    %v424 = vld [vmem:[#allocation6 + $0x28] sm:$0xf]
    %v425 = vld [vmem:[#allocation6 + $0x2c] sm:$0xf]
    %v426 = vld [vmem:[#allocation6 + $0x30] sm:$0xf]
    %v427 = vld [vmem:[#allocation6 + $0x34] sm:$0xf]
    %v428 = vld [vmem:[#allocation6 + $0x38] sm:$0xf]
    %v429 = vld [vmem:[#allocation6 + $0x3c] sm:$0xf]
    %v430 = vld [vmem:[%s8] sm:$0x1]
    %v432 = vlaneseq
    %v433 = vshrl.u32 %v432, 7
    %v434 = vsub.s32 0, %v433
    %v435 = vrot.slane %v430, %v434
    %v453 = vunpack.c.l.b16 %v414
    %v454 = vunpack.c.l.b16 %v415
    %v455 = vunpack.c.l.b16 %v416
    %v456 = vunpack.c.l.b16 %v417
    %v457 = vunpack.c.l.b16 %v418
    %v458 = vunpack.c.l.b16 %v419
    %v459 = vunpack.c.l.b16 %v420
    %v460 = vunpack.c.l.b16 %v421
    %v461 = vunpack.c.l.b16 %v422
    %v462 = vunpack.c.l.b16 %v423
    %v463 = vunpack.c.l.b16 %v424
    %v464 = vunpack.c.l.b16 %v425
    %v465 = vunpack.c.l.b16 %v426
    %v466 = vunpack.c.l.b16 %v427
    %v467 = vunpack.c.l.b16 %v428
    %v468 = vunpack.c.l.b16 %v429
    %v469 = vpack.c.b16 %v454, %v453
    %v470 = vpack.c.b16 %v456, %v455
    %v471 = vpack.c.b16 %v458, %v457
    %v472 = vpack.c.b16 %v460, %v459
    %v473 = vpack.c.b16 %v462, %v461
    %v474 = vpack.c.b16 %v464, %v463
    %v475 = vpack.c.b16 %v466, %v465
    %v476 = vpack.c.b16 %v468, %v467
    %485 = vmatprep.subr.bf16.mxu0 0
    %486 = vmatpush1.bf16.msra.mxu0 %v469
    %487 = vmatprep.subr.bf16.mxu0 0
    %488 = vmatpush1.bf16.msra.mxu0 %v470
    %489 = vmatprep.subr.bf16.mxu0 0
    %490 = vmatpush1.bf16.msra.mxu0 %v471
    %491 = vmatprep.subr.bf16.mxu0 0
    %492 = vmatpush1.bf16.msra.mxu0 %v472
    %493 = vmatprep.subr.bf16.mxu0 0
    %494 = vmatpush1.bf16.msra.mxu0 %v473
    %495 = vmatprep.subr.bf16.mxu0 0
    %496 = vmatpush1.bf16.msra.mxu0 %v474
    %497 = vmatprep.subr.bf16.mxu0 0
    %498 = vmatpush1.bf16.msra.mxu0 %v475
    %499 = vmatprep.subr.bf16.mxu0 0
    %500 = vmatpush1.bf16.msra.mxu0 %v476
    %501 = vmatprep.subr.bf16.mxu0 0
    %502 = vmatpush1.bf16.msra.mxu0 0
    %503 = vmatprep.subr.bf16.mxu0 0
    %504 = vmatpush1.bf16.msra.mxu0 0
    %505 = vmatprep.subr.bf16.mxu0 0
    %506 = vmatpush1.bf16.msra.mxu0 0
    %507 = vmatprep.subr.bf16.mxu0 0
    %508 = vmatpush1.bf16.msra.mxu0 0
    %509 = vmatprep.subr.bf16.mxu0 0
    %510 = vmatpush1.bf16.msra.mxu0 0
    %511 = vmatprep.subr.bf16.mxu0 0
    %512 = vmatpush1.bf16.msra.mxu0 0
    %513 = vmatprep.subr.bf16.mxu0 0
    %514 = vmatpush1.bf16.msra.mxu0 0
    %515 = vmatprep.subr.bf16.mxu0 0
    %516 = vmatpush1.bf16.msra.mxu0 0
    %517 = vmatprep.mubr.bf16.mxu0 0
    %518 = vmatmul.mubr.bf16.gmra.mrb[0].mxu0 %v413
    %v519 = vpop.f32.mrb[0].mxu0
    %v520 = vadd.f32 %v435, %v519
    %v521 = vpop.f32.mrb[0].mxu0
    %v522 = vpop.f32.mrb[0].mxu0
    %v523 = vpop.f32.mrb[0].mxu0
    %524 = vdwg.mxu0
    %525 = vst [vmem:[%s9] sm:$0xff] %v520
    // Predicated region
    $region50: #{sfnn_fused_forward.1} parent=1 // pred_check
      _
    $region51: #{sfnn_fused_forward.1} parent=1 // pred_check_branch
      %527 = sbr.rel (0) target = $region53
    $region52: #{sfnn_fused_forward.1} parent=1 // pred_region
      _
    $region53: #{sfnn_fused_forward.1} parent=1 // pred_fallthru
      _
    // Predicated region
    $region54: #{sfnn_fused_forward.1} parent=1 // pred_check
      _
    $region55: #{sfnn_fused_forward.1} parent=1 // pred_check_branch
      %529 = sbr.rel (0) target = $region57
    $region56: #{sfnn_fused_forward.1} parent=1 // pred_region
      _
    $region57: #{sfnn_fused_forward.1} parent=1 // pred_fallthru
      _
    %530 = vsyncpa [#allocation3], 1
    %531 = vsyncpa [#allocation5], 1

</llo_original>
